<compile_context>
chip_gen: v7x
topology: tpu7x:2x2x1
jax: 0.10.0
libtpu: 0.0.40
codegen_flags: <defaults>
</compile_context>

<pallas_src>
import functools

import jax
import jax.numpy as jnp
from jax.experimental import pallas as pl
from jax.experimental.pallas import tpu as pltpu


# ----------------------------------------------------------------------------
# Parameter folding: (depthwise, pointwise, batchnorm, biases) -> one matmul
# ----------------------------------------------------------------------------
def fold_params(params, K, R):
    """Fold BN + biases + depthwise weights into per-sub-block (W_fused, b) pairs."""
    rpw_w = params["rpw_w"].astype(jnp.float32)       # (Cout, Cin)
    rpw_b = params["rpw_b"].astype(jnp.float32)       # (Cout,)
    rbn_s = params["rbn_scale"].astype(jnp.float32)
    rbn_sh = params["rbn_shift"].astype(jnp.float32)
    wres = rbn_s[:, None] * rpw_w                      # (Cout, Cin)
    bres = rbn_s * rpw_b + rbn_sh                      # (Cout,)

    subs = []
    for sb in params["sub_blocks"]:
        dw_w = sb["dw_w"].astype(jnp.float32)          # (Ci, K)
        dw_b = sb["dw_b"].astype(jnp.float32)          # (Ci,)
        pw_w = sb["pw_w"].astype(jnp.float32)          # (Cout, Ci)
        pw_b = sb["pw_b"].astype(jnp.float32)          # (Cout,)
        bn_s = sb["bn_scale"].astype(jnp.float32)
        bn_sh = sb["bn_shift"].astype(jnp.float32)
        Cout, Ci = pw_w.shape
        # fused weight: [co, k*Ci + ci] = pw_w[co, ci] * dw_w[ci, k]
        w_fused = (pw_w[:, None, :] * dw_w.T[None, :, :]).reshape(Cout, K * Ci)
        b_total = pw_w @ dw_b + pw_b
        # fold eval-mode BN affine
        w_fused = bn_s[:, None] * w_fused
        b_total = bn_s * b_total + bn_sh
        subs.append((w_fused, b_total))
    return dict(wres=wres, bres=bres, subs=subs)


# ----------------------------------------------------------------------------
# Pallas kernel (one batch-tile of Bt samples per grid step)
# ----------------------------------------------------------------------------
def make_mainblock_kernel(K: int, R: int, L: int, compute_dtype):
    assert K % 2 == 1, "padding='same' handled for odd kernel sizes only"
    pad = (K - 1) // 2

    def stack_shifts(x):
        # x: (C, W) f32 with W = Bt*L (samples concatenated along lanes).
        # Returns (K*C, W): row k*C + c holds x[c, t + (k - pad)] with zero
        # padding at each per-sample boundary (t = within-sample position).
        C, W = x.shape
        t = jax.lax.broadcasted_iota(jnp.int32, (1, W), 1) % L
        parts = []
        for k in range(K):
            d = k - pad
            if d == 0:
                parts.append(x)
                continue
            rolled = pltpu.roll(x, shift=(-d) % W, axis=1)   # XLU, co-issues w/ MXU
            if d > 0:
                valid = t < (L - d)
            else:
                valid = t >= (-d)
            parts.append(jnp.where(valid, rolled, 0.0))
        return jnp.concatenate(parts, axis=0)

    def kernel(x_ref, wres_ref, bres_ref, *rest):
        # rest = [w_0, b_0, ..., w_{R-1}, b_{R-1}, out_ref, res_scratch]
        out_ref = rest[2 * R]
        res_ref = rest[2 * R + 1]

        x_lo = x_ref[...]                               # (Cin, W) compute_dtype
        # residual branch: folded 1x1 conv + BN -> one MXU matmul, kept in VMEM scratch
        res_ref[...] = (
            jnp.dot(wres_ref[...], x_lo, preferred_element_type=jnp.float32)
            + bres_ref[...]
        )

        cur = x_lo.astype(jnp.float32)                  # f32 for shift/mask math
        for i in range(R):
            w = rest[2 * i][...]                        # (Cout, K*Ci) compute_dtype
            b = rest[2 * i + 1][...]                    # (Cout, 1)    f32
            stacked = stack_shifts(cur).astype(compute_dtype)
            # fused depthwise+pointwise+BN+bias: single MXU matmul
            y = jnp.dot(w, stacked, preferred_element_type=jnp.float32) + b
            if i == R - 1:
                y = y + res_ref[...]                    # residual add (last sub-block)
            y = jnp.maximum(y, 0.0)                     # ReLU; dropout = identity
            if i < R - 1:
                cur = y
            else:
                out_ref[...] = y.astype(out_ref.dtype)

    return kernel


# ----------------------------------------------------------------------------
# Wrapper
# ----------------------------------------------------------------------------
def mainblock_forward(x, params, *, kernel_size: int, R: int,
                      batch_tile: int = 2, compute_dtype=jnp.bfloat16):
    N, Cin, L = x.shape
    folded = fold_params(params, kernel_size, R)
    Cout = folded["wres"].shape[0]

    Bt = max(1, min(batch_tile, N))
    n_steps = pl.cdiv(N, Bt)
    Npad = n_steps * Bt

    # (N, Cin, L) -> (Cin, Npad*L): channels on sublanes, time (lane-dense) last.
    xt = jnp.transpose(x, (1, 0, 2))                    # (Cin, N, L)
    if Npad != N:
        xt = jnp.pad(xt, ((0, 0), (0, Npad - N), (0, 0)))
    xt = xt.reshape(Cin, Npad * L).astype(compute_dtype)

    flat_inputs = [
        xt,
        folded["wres"].astype(compute_dtype),
        folded["bres"].reshape(-1, 1),                  # f32 bias column
    ]
    for (w, b) in folded["subs"]:
        flat_inputs += [w.astype(compute_dtype), b.reshape(-1, 1)]

    def full_spec(a):
        nd = a.ndim
        return pl.BlockSpec(a.shape, lambda n, _nd=nd: (0,) * _nd)

    in_specs = [pl.BlockSpec((Cin, Bt * L), lambda n: (0, n))]
    in_specs += [full_spec(a) for a in flat_inputs[1:]]

    kernel = make_mainblock_kernel(kernel_size, R, L, compute_dtype)

    out = pl.pallas_call(
        kernel,
        out_shape=jax.ShapeDtypeStruct((Cout, Npad * L), jnp.float32),
        grid=(n_steps,),
        in_specs=in_specs,
        out_specs=pl.BlockSpec((Cout, Bt * L), lambda n: (0, n)),
        scratch_shapes=[pltpu.VMEM((Cout, Bt * L), jnp.float32)],   # residual
        compiler_params=pltpu.CompilerParams(
            dimension_semantics=("parallel",)),
    )(*flat_inputs)

    out = out.reshape(Cout, Npad, L)[:, :N, :]
    return jnp.transpose(out, (1, 0, 2))                # (N, Cout, L)


# ----------------------------------------------------------------------------
# References
# ----------------------------------------------------------------------------
def mainblock_reference_quantized(x, params, *, kernel_size, R, compute_dtype):
    """Mirrors the kernel numerics (folded weights, bf16 matmul operands)."""
    K = kernel_size
    pad = (K - 1) // 2
    L = x.shape[2]
    folded = fold_params(params, K, R)

    def q(a):
        return a.astype(compute_dtype).astype(jnp.float32)

    xq = q(x)
    res = (jnp.einsum("oc,ncl->nol", q(folded["wres"]), xq)
           + folded["bres"][None, :, None])
    cur = xq
    for i, (w, b) in enumerate(folded["subs"]):
        cur_q = q(cur)
        parts = []
        for k in range(K):
            d = k - pad
            if d == 0:
                parts.append(cur_q)
            elif d > 0:
                parts.append(jnp.pad(cur_q[:, :, d:], ((0, 0), (0, 0), (0, d))))
            else:
                parts.append(jnp.pad(cur_q[:, :, :L + d], ((0, 0), (0, 0), (-d, 0))))
        stacked = jnp.concatenate(parts, axis=1)         # (N, K*C, L)
        y = jnp.einsum("ok,nkl->nol", q(w), stacked) + b[None, :, None]
        if i == R - 1:
            y = y + res
        cur = jnp.maximum(y, 0.0)
    return cur


def mainblock_reference_f32(x, params, *, kernel_size, R):
    """Plain f32 reference following the PyTorch module structure (eval mode)."""
    K = kernel_size
    pad = (K - 1) // 2
    L = x.shape[2]

    def pw(x, w, b):
        return jnp.einsum("oc,ncl->nol", w, x) + b[None, :, None]

    def dw(x, w, b):
        xp = jnp.pad(x, ((0, 0), (0, 0), (pad, pad)))
        out = sum(w[None, :, k:k + 1] * xp[:, :, k:k + L] for k in range(K))
        return out + b[None, :, None]

    def bn(x, s, sh):
        return s[None, :, None] * x + sh[None, :, None]

    res = bn(pw(x, params["rpw_w"], params["rpw_b"]),
             params["rbn_scale"], params["rbn_shift"])
    cur = x
    for i, sb in enumerate(params["sub_blocks"]):
        cur = dw(cur, sb["dw_w"], sb["dw_b"])
        cur = pw(cur, sb["pw_w"], sb["pw_b"])
        cur = bn(cur, sb["bn_scale"], sb["bn_shift"])
        if i == R - 1:
            cur = cur + res
        cur = jnp.maximum(cur, 0.0)
    return cur


# ----------------------------------------------------------------------------
# Deterministic parameter construction (shapes follow MainBlock.__init__)
# ----------------------------------------------------------------------------
def init_params(key, in_channels, out_channels, kernel_size, R):
    eps = 1e-5

    def bn_fold(key, C):
        k1, k2, k3, k4 = jax.random.split(key, 4)
        gamma = jax.random.uniform(k1, (C,), minval=0.5, maxval=1.5)
        beta = 0.1 * jax.random.normal(k2, (C,))
        r_mean = 0.1 * jax.random.normal(k3, (C,))
        r_var = jax.random.uniform(k4, (C,), minval=0.5, maxval=1.5)
        scale = gamma / jnp.sqrt(r_var + eps)
        shift = beta - r_mean * scale
        return scale, shift

    keys = jax.random.split(key, 3 + R)
    rpw_w = 0.1 * jax.random.normal(keys[0], (out_channels, in_channels))
    rpw_b = 0.05 * jax.random.normal(keys[1], (out_channels,))
    rbn_scale, rbn_shift = bn_fold(keys[2], out_channels)

    sub_blocks = []
    cin = in_channels
    for i in range(R):
        k1, k2, k3, k4, k5 = jax.random.split(keys[3 + i], 5)
        sub_blocks.append(dict(
            dw_w=0.2 * jax.random.normal(k1, (cin, kernel_size)),   # depthwise (C,1,K)->(C,K)
            dw_b=0.05 * jax.random.normal(k2, (cin,)),
            pw_w=0.1 * jax.random.normal(k3, (out_channels, cin)),  # 1x1 conv weight
            pw_b=0.05 * jax.random.normal(k4, (out_channels,)),
        ))
        s, sh = bn_fold(k5, out_channels)
        sub_blocks[-1]["bn_scale"] = s
        sub_blocks[-1]["bn_shift"] = sh
        cin = out_channels

    return dict(rpw_w=rpw_w, rpw_b=rpw_b, rbn_scale=rbn_scale,
                rbn_shift=rbn_shift, sub_blocks=sub_blocks)


# ----------------------------------------------------------------------------
if __name__ == "__main__":
    N, Cin, Cout, L = 4, 16, 32, 128
    K, R = 5, 2

    key = jax.random.PRNGKey(0)
    kx, kp = jax.random.split(key)
    x = jax.random.normal(kx, (N, Cin, L), dtype=jnp.float32)
    params = init_params(kp, Cin, Cout, K, R)

    fwd = functools.partial(mainblock_forward, kernel_size=K, R=R,
                            batch_tile=2, compute_dtype=jnp.bfloat16)
    out = jax.jit(fwd)(x, params)
    out = jax.block_until_ready(out)
    assert out.shape == (N, Cout, L)

    # Strict check vs a reference that mirrors the kernel numerics (folded + bf16 operands).
    ref_q = mainblock_reference_quantized(x, params, kernel_size=K, R=R,
                                          compute_dtype=jnp.bfloat16)
    assert jnp.allclose(out, ref_q, atol=2e-3, rtol=2e-3), "mismatch vs quantized reference"

    # Loose check vs the plain f32 PyTorch-structured reference (bf16 drift only).
    ref_f32 = mainblock_reference_f32(x, params, kernel_size=K, R=R)
    assert jnp.allclose(out, ref_f32, atol=1e-1, rtol=1e-1), "mismatch vs f32 reference"

    print("KERNEL_OK")
</pallas_src>

<mosaic_0001>
module attributes {stable_mosaic.version = 11 : i64} {
  func.func @kernel(%arg0: i32, %arg1: memref<16x256xbf16, #tpu.memory_space<vmem>>, %arg2: memref<32x16xbf16, #tpu.memory_space<vmem>>, %arg3: memref<32x1xf32, #tpu.memory_space<vmem>>, %arg4: memref<32x80xbf16, #tpu.memory_space<vmem>>, %arg5: memref<32x1xf32, #tpu.memory_space<vmem>>, %arg6: memref<32x160xbf16, #tpu.memory_space<vmem>>, %arg7: memref<32x1xf32, #tpu.memory_space<vmem>>, %arg8: memref<32x256xf32, #tpu.memory_space<vmem>>, %arg9: memref<32x256xf32, #tpu.memory_space<vmem>>) attributes {dimension_semantics = [#tpu.dimension_semantics<parallel>], iteration_bounds = array<i64: 2>, scalar_prefetch = 0 : i64, scratch_operands = 1 : i64, tpu.core_type = #tpu.core_type<tc>, window_params = [{transform_indices = @transform_0, window_bounds = array<i64: 16, 256>}, {pipeline_mode = #tpu.pipeline_mode<synchronous>, transform_indices = @transform_1, window_bounds = array<i64: 32, 16>}, {pipeline_mode = #tpu.pipeline_mode<synchronous>, transform_indices = @transform_2, window_bounds = array<i64: 32, 1>}, {pipeline_mode = #tpu.pipeline_mode<synchronous>, transform_indices = @transform_3, window_bounds = array<i64: 32, 80>}, {pipeline_mode = #tpu.pipeline_mode<synchronous>, transform_indices = @transform_4, window_bounds = array<i64: 32, 1>}, {pipeline_mode = #tpu.pipeline_mode<synchronous>, transform_indices = @transform_5, window_bounds = array<i64: 32, 160>}, {pipeline_mode = #tpu.pipeline_mode<synchronous>, transform_indices = @transform_6, window_bounds = array<i64: 32, 1>}, {transform_indices = @transform_7, window_bounds = array<i64: 32, 256>}]} {
    %c0 = arith.constant 0 : index
    %c0_0 = arith.constant 0 : index
    %0 = vector.load %arg1[%c0, %c0_0] : memref<16x256xbf16, #tpu.memory_space<vmem>>, vector<16x256xbf16>
    %c0_1 = arith.constant 0 : index
    %c0_2 = arith.constant 0 : index
    %1 = vector.load %arg2[%c0_1, %c0_2] : memref<32x16xbf16, #tpu.memory_space<vmem>>, vector<32x16xbf16>
    %cst = arith.constant dense<0.000000e+00> : vector<32x256xf32>
    %2 = tpu.matmul %1, %0, %cst {dimension_numbers = #tpu.dot_dimension_numbers<[1], [0], [0], [1], [0, 0, 1, 1], [], []>} : vector<32x16xbf16>, vector<16x256xbf16>, vector<32x256xf32> -> vector<32x256xf32>
    %c0_3 = arith.constant 0 : index
    %c0_4 = arith.constant 0 : index
    %3 = vector.load %arg3[%c0_3, %c0_4] : memref<32x1xf32, #tpu.memory_space<vmem>>, vector<32x1xf32>
    %4 = vector.broadcast %3 : vector<32x1xf32> to vector<32x256xf32>
    %5 = arith.addf %2, %4 : vector<32x256xf32>
    %c0_5 = arith.constant 0 : index
    %c0_6 = arith.constant 0 : index
    %6 = vector.load %arg9[%c0_5, %c0_6] : memref<32x256xf32, #tpu.memory_space<vmem>>, vector<32x256xf32>
    tpu.vector_store %arg9[%c0_5, %c0_6], %5 {strides = array<i32>} : memref<32x256xf32, #tpu.memory_space<vmem>>, vector<32x256xf32>,
    %7 = arith.extf %0 : vector<16x256xbf16> to vector<16x256xf32>
    %c0_7 = arith.constant 0 : index
    %c0_8 = arith.constant 0 : index
    %8 = vector.load %arg4[%c0_7, %c0_8] : memref<32x80xbf16, #tpu.memory_space<vmem>>, vector<32x80xbf16>
    %c0_9 = arith.constant 0 : index
    %c0_10 = arith.constant 0 : index
    %9 = vector.load %arg5[%c0_9, %c0_10] : memref<32x1xf32, #tpu.memory_space<vmem>>, vector<32x1xf32>
    %10 = tpu.iota {dimensions = array<i32: 1>} : vector<1x256xi32>
    %c128_i32 = arith.constant 128 : i32
    %c0_i32 = arith.constant 0 : i32
    %11 = arith.cmpi eq, %c128_i32, %c0_i32 : i32
    %c1_i32 = arith.constant 1 : i32
    %12 = arith.select %11, %c1_i32, %c128_i32 : i32
    %13 = vector.broadcast %12 : i32 to vector<1x256xi32>
    %14 = arith.remsi %10, %13 : vector<1x256xi32>
    %c0_i32_11 = arith.constant 0 : i32
    %15 = vector.broadcast %c0_i32_11 : i32 to vector<1x256xi32>
    %16 = arith.cmpi ne, %14, %15 : vector<1x256xi32>
    %c0_i32_12 = arith.constant 0 : i32
    %17 = vector.broadcast %c0_i32_12 : i32 to vector<1x256xi32>
    %18 = arith.cmpi slt, %14, %17 : vector<1x256xi32>
    %c0_i32_13 = arith.constant 0 : i32
    %19 = arith.cmpi slt, %12, %c0_i32_13 : i32
    %20 = vector.broadcast %19 : i1 to vector<1x256xi1>
    %21 = vector.broadcast %20 : vector<1x256xi1> to vector<1x256xi1>
    %22 = arith.xori %18, %21 : vector<1x256xi1>
    %23 = arith.andi %22, %16 : vector<1x256xi1>
    %24 = vector.broadcast %12 : i32 to vector<1x256xi32>
    %25 = arith.addi %14, %24 : vector<1x256xi32>
    %26 = arith.select %23, %25, %14 : vector<1x256xi1>, vector<1x256xi32>
    %c2_i32 = arith.constant 2 : i32
    %27 = tpu.dynamic_rotate %7 by %c2_i32 dim 1 : vector<16x256xf32>, i32 -> vector<16x256xf32>
    %c2_i32_14 = arith.constant 2 : i32
    %28 = vector.broadcast %c2_i32_14 : i32 to vector<1x256xi32>
    %29 = arith.cmpi sge, %26, %28 : vector<1x256xi32>
    %cst_15 = arith.constant 0.000000e+00 : f32
    %30 = vector.shape_cast %29 : vector<1x256xi1> to vector<1x256xi1>
    %31 = vector.broadcast %30 : vector<1x256xi1> to vector<16x256xi1>
    %32 = vector.broadcast %cst_15 : f32 to vector<16x256xf32>
    %33 = arith.select %31, %27, %32 : vector<16x256xi1>, vector<16x256xf32>
    %c1_i32_16 = arith.constant 1 : i32
    %34 = tpu.dynamic_rotate %7 by %c1_i32_16 dim 1 : vector<16x256xf32>, i32 -> vector<16x256xf32>
    %c1_i32_17 = arith.constant 1 : i32
    %35 = vector.broadcast %c1_i32_17 : i32 to vector<1x256xi32>
    %36 = arith.cmpi sge, %26, %35 : vector<1x256xi32>
    %cst_18 = arith.constant 0.000000e+00 : f32
    %37 = vector.shape_cast %36 : vector<1x256xi1> to vector<1x256xi1>
    %38 = vector.broadcast %37 : vector<1x256xi1> to vector<16x256xi1>
    %39 = vector.broadcast %cst_18 : f32 to vector<16x256xf32>
    %40 = arith.select %38, %34, %39 : vector<16x256xi1>, vector<16x256xf32>
    %c255_i32 = arith.constant 255 : i32
    %41 = tpu.dynamic_rotate %7 by %c255_i32 dim 1 : vector<16x256xf32>, i32 -> vector<16x256xf32>
    %c127_i32 = arith.constant 127 : i32
    %42 = vector.broadcast %c127_i32 : i32 to vector<1x256xi32>
    %43 = arith.cmpi slt, %26, %42 : vector<1x256xi32>
    %cst_19 = arith.constant 0.000000e+00 : f32
    %44 = vector.shape_cast %43 : vector<1x256xi1> to vector<1x256xi1>
    %45 = vector.broadcast %44 : vector<1x256xi1> to vector<16x256xi1>
    %46 = vector.broadcast %cst_19 : f32 to vector<16x256xf32>
    %47 = arith.select %45, %41, %46 : vector<16x256xi1>, vector<16x256xf32>
    %c254_i32 = arith.constant 254 : i32
    %48 = tpu.dynamic_rotate %7 by %c254_i32 dim 1 : vector<16x256xf32>, i32 -> vector<16x256xf32>
    %c126_i32 = arith.constant 126 : i32
    %49 = vector.broadcast %c126_i32 : i32 to vector<1x256xi32>
    %50 = arith.cmpi slt, %26, %49 : vector<1x256xi32>
    %cst_20 = arith.constant 0.000000e+00 : f32
    %51 = vector.shape_cast %50 : vector<1x256xi1> to vector<1x256xi1>
    %52 = vector.broadcast %51 : vector<1x256xi1> to vector<16x256xi1>
    %53 = vector.broadcast %cst_20 : f32 to vector<16x256xf32>
    %54 = arith.select %52, %48, %53 : vector<16x256xi1>, vector<16x256xf32>
    %55 = tpu.concatenate %33, %40, %7, %47, %54 in 0 : vector<16x256xf32>, vector<16x256xf32>, vector<16x256xf32>, vector<16x256xf32>, vector<16x256xf32> -> vector<80x256xf32>
    %56 = arith.truncf %55 : vector<80x256xf32> to vector<80x256xbf16>
    %cst_21 = arith.constant dense<0.000000e+00> : vector<32x256xf32>
    %57 = tpu.matmul %8, %56, %cst_21 {dimension_numbers = #tpu.dot_dimension_numbers<[1], [0], [0], [1], [0, 0, 1, 1], [], []>} : vector<32x80xbf16>, vector<80x256xbf16>, vector<32x256xf32> -> vector<32x256xf32>
    %58 = vector.broadcast %9 : vector<32x1xf32> to vector<32x256xf32>
    %59 = arith.addf %57, %58 : vector<32x256xf32>
    %cst_22 = arith.constant 0.000000e+00 : f32
    %60 = vector.broadcast %cst_22 : f32 to vector<32x256xf32>
    %61 = arith.maximumf %59, %60 : vector<32x256xf32>
    %c0_23 = arith.constant 0 : index
    %c0_24 = arith.constant 0 : index
    %62 = vector.load %arg6[%c0_23, %c0_24] : memref<32x160xbf16, #tpu.memory_space<vmem>>, vector<32x160xbf16>
    %c0_25 = arith.constant 0 : index
    %c0_26 = arith.constant 0 : index
    %63 = vector.load %arg7[%c0_25, %c0_26] : memref<32x1xf32, #tpu.memory_space<vmem>>, vector<32x1xf32>
    %64 = tpu.iota {dimensions = array<i32: 1>} : vector<1x256xi32>
    %c128_i32_27 = arith.constant 128 : i32
    %c0_i32_28 = arith.constant 0 : i32
    %65 = arith.cmpi eq, %c128_i32_27, %c0_i32_28 : i32
    %c1_i32_29 = arith.constant 1 : i32
    %66 = arith.select %65, %c1_i32_29, %c128_i32_27 : i32
    %67 = vector.broadcast %66 : i32 to vector<1x256xi32>
    %68 = arith.remsi %64, %67 : vector<1x256xi32>
    %c0_i32_30 = arith.constant 0 : i32
    %69 = vector.broadcast %c0_i32_30 : i32 to vector<1x256xi32>
    %70 = arith.cmpi ne, %68, %69 : vector<1x256xi32>
    %c0_i32_31 = arith.constant 0 : i32
    %71 = vector.broadcast %c0_i32_31 : i32 to vector<1x256xi32>
    %72 = arith.cmpi slt, %68, %71 : vector<1x256xi32>
    %c0_i32_32 = arith.constant 0 : i32
    %73 = arith.cmpi slt, %66, %c0_i32_32 : i32
    %74 = vector.broadcast %73 : i1 to vector<1x256xi1>
    %75 = vector.broadcast %74 : vector<1x256xi1> to vector<1x256xi1>
    %76 = arith.xori %72, %75 : vector<1x256xi1>
    %77 = arith.andi %76, %70 : vector<1x256xi1>
    %78 = vector.broadcast %66 : i32 to vector<1x256xi32>
    %79 = arith.addi %68, %78 : vector<1x256xi32>
    %80 = arith.select %77, %79, %68 : vector<1x256xi1>, vector<1x256xi32>
    %c2_i32_33 = arith.constant 2 : i32
    %81 = tpu.dynamic_rotate %61 by %c2_i32_33 dim 1 : vector<32x256xf32>, i32 -> vector<32x256xf32>
    %c2_i32_34 = arith.constant 2 : i32
    %82 = vector.broadcast %c2_i32_34 : i32 to vector<1x256xi32>
    %83 = arith.cmpi sge, %80, %82 : vector<1x256xi32>
    %cst_35 = arith.constant 0.000000e+00 : f32
    %84 = vector.shape_cast %83 : vector<1x256xi1> to vector<1x256xi1>
    %85 = vector.broadcast %84 : vector<1x256xi1> to vector<32x256xi1>
    %86 = vector.broadcast %cst_35 : f32 to vector<32x256xf32>
    %87 = arith.select %85, %81, %86 : vector<32x256xi1>, vector<32x256xf32>
    %c1_i32_36 = arith.constant 1 : i32
    %88 = tpu.dynamic_rotate %61 by %c1_i32_36 dim 1 : vector<32x256xf32>, i32 -> vector<32x256xf32>
    %c1_i32_37 = arith.constant 1 : i32
    %89 = vector.broadcast %c1_i32_37 : i32 to vector<1x256xi32>
    %90 = arith.cmpi sge, %80, %89 : vector<1x256xi32>
    %cst_38 = arith.constant 0.000000e+00 : f32
    %91 = vector.shape_cast %90 : vector<1x256xi1> to vector<1x256xi1>
    %92 = vector.broadcast %91 : vector<1x256xi1> to vector<32x256xi1>
    %93 = vector.broadcast %cst_38 : f32 to vector<32x256xf32>
    %94 = arith.select %92, %88, %93 : vector<32x256xi1>, vector<32x256xf32>
    %c255_i32_39 = arith.constant 255 : i32
    %95 = tpu.dynamic_rotate %61 by %c255_i32_39 dim 1 : vector<32x256xf32>, i32 -> vector<32x256xf32>
    %c127_i32_40 = arith.constant 127 : i32
    %96 = vector.broadcast %c127_i32_40 : i32 to vector<1x256xi32>
    %97 = arith.cmpi slt, %80, %96 : vector<1x256xi32>
    %cst_41 = arith.constant 0.000000e+00 : f32
    %98 = vector.shape_cast %97 : vector<1x256xi1> to vector<1x256xi1>
    %99 = vector.broadcast %98 : vector<1x256xi1> to vector<32x256xi1>
    %100 = vector.broadcast %cst_41 : f32 to vector<32x256xf32>
    %101 = arith.select %99, %95, %100 : vector<32x256xi1>, vector<32x256xf32>
    %c254_i32_42 = arith.constant 254 : i32
    %102 = tpu.dynamic_rotate %61 by %c254_i32_42 dim 1 : vector<32x256xf32>, i32 -> vector<32x256xf32>
    %c126_i32_43 = arith.constant 126 : i32
    %103 = vector.broadcast %c126_i32_43 : i32 to vector<1x256xi32>
    %104 = arith.cmpi slt, %80, %103 : vector<1x256xi32>
    %cst_44 = arith.constant 0.000000e+00 : f32
    %105 = vector.shape_cast %104 : vector<1x256xi1> to vector<1x256xi1>
    %106 = vector.broadcast %105 : vector<1x256xi1> to vector<32x256xi1>
    %107 = vector.broadcast %cst_44 : f32 to vector<32x256xf32>
    %108 = arith.select %106, %102, %107 : vector<32x256xi1>, vector<32x256xf32>
    %109 = tpu.concatenate %87, %94, %61, %101, %108 in 0 : vector<32x256xf32>, vector<32x256xf32>, vector<32x256xf32>, vector<32x256xf32>, vector<32x256xf32> -> vector<160x256xf32>
    %110 = arith.truncf %109 : vector<160x256xf32> to vector<160x256xbf16>
    %cst_45 = arith.constant dense<0.000000e+00> : vector<32x256xf32>
    %111 = tpu.matmul %62, %110, %cst_45 {dimension_numbers = #tpu.dot_dimension_numbers<[1], [0], [0], [1], [0, 0, 1, 1], [], []>} : vector<32x160xbf16>, vector<160x256xbf16>, vector<32x256xf32> -> vector<32x256xf32>
    %112 = vector.broadcast %63 : vector<32x1xf32> to vector<32x256xf32>
    %113 = arith.addf %111, %112 : vector<32x256xf32>
    %c0_46 = arith.constant 0 : index
    %c0_47 = arith.constant 0 : index
    %114 = vector.load %arg9[%c0_46, %c0_47] : memref<32x256xf32, #tpu.memory_space<vmem>>, vector<32x256xf32>
    %115 = arith.addf %113, %114 : vector<32x256xf32>
    %cst_48 = arith.constant 0.000000e+00 : f32
    %116 = vector.broadcast %cst_48 : f32 to vector<32x256xf32>
    %117 = arith.maximumf %115, %116 : vector<32x256xf32>
    %c0_49 = arith.constant 0 : index
    %c0_50 = arith.constant 0 : index
    %118 = vector.load %arg8[%c0_49, %c0_50] : memref<32x256xf32, #tpu.memory_space<vmem>>, vector<32x256xf32>
    tpu.vector_store %arg8[%c0_49, %c0_50], %117 {strides = array<i32>} : memref<32x256xf32, #tpu.memory_space<vmem>>, vector<32x256xf32>,
    return
  }
  func.func @transform_0(%arg0: i32) -> (i32, i32) {
    %c0_i32 = arith.constant 0 : i32
    %c0_i32_0 = arith.constant 0 : i32
    return %c0_i32, %arg0 : i32, i32
  }
  func.func @transform_1(%arg0: i32) -> (i32, i32) {
    %c0_i32 = arith.constant 0 : i32
    %c0_i32_0 = arith.constant 0 : i32
    %c0_i32_1 = arith.constant 0 : i32
    return %c0_i32, %c0_i32_0 : i32, i32
  }
  func.func @transform_2(%arg0: i32) -> (i32, i32) {
    %c0_i32 = arith.constant 0 : i32
    %c0_i32_0 = arith.constant 0 : i32
    %c0_i32_1 = arith.constant 0 : i32
    return %c0_i32, %c0_i32_0 : i32, i32
  }
  func.func @transform_3(%arg0: i32) -> (i32, i32) {
    %c0_i32 = arith.constant 0 : i32
    %c0_i32_0 = arith.constant 0 : i32
    %c0_i32_1 = arith.constant 0 : i32
    return %c0_i32, %c0_i32_0 : i32, i32
  }
  func.func @transform_4(%arg0: i32) -> (i32, i32) {
    %c0_i32 = arith.constant 0 : i32
    %c0_i32_0 = arith.constant 0 : i32
    %c0_i32_1 = arith.constant 0 : i32
    return %c0_i32, %c0_i32_0 : i32, i32
  }
  func.func @transform_5(%arg0: i32) -> (i32, i32) {
    %c0_i32 = arith.constant 0 : i32
    %c0_i32_0 = arith.constant 0 : i32
    %c0_i32_1 = arith.constant 0 : i32
    return %c0_i32, %c0_i32_0 : i32, i32
  }
  func.func @transform_6(%arg0: i32) -> (i32, i32) {
    %c0_i32 = arith.constant 0 : i32
    %c0_i32_0 = arith.constant 0 : i32
    %c0_i32_1 = arith.constant 0 : i32
    return %c0_i32, %c0_i32_0 : i32, i32
  }
  func.func @transform_7(%arg0: i32) -> (i32, i32) {
    %c0_i32 = arith.constant 0 : i32
    %c0_i32_0 = arith.constant 0 : i32
    return %c0_i32, %arg0 : i32, i32
  }
}

</mosaic_0001>

<llo_original>
// kernel: mainblock_forward.1
$region0: #{mainblock_forward.1}
  #allocation0 [shape = 'u32[]', space=smem, size = 0x4, offset = 0x4, fixed_abs, tag = 'smem constant byte address 0x4 - core index']
  #allocation1 [shape = 'u32[144,128]{1,0:T(1,128)}', space=vmem, size = 0x12000, scoped, tag = 'internal scratch']
  #allocation2 [shape = 'f32[32,256]{1,0:T(8,128)}', space=vmem, size = 0x8000, scoped, tag = 'scratch operand']
  %s0 = inlined_call_operand.vmem [shape: bf16[16,512], index: 0, kind: input, shape index: {}]
  %s1 = inlined_call_operand.vmem [shape: bf16[32,16], index: 1, kind: input, shape index: {}]
  %s2 = inlined_call_operand.vmem [shape: f32[32,1], index: 2, kind: input, shape index: {}]
  %s3 = inlined_call_operand.vmem [shape: bf16[32,80], index: 3, kind: input, shape index: {}]
  %s4 = inlined_call_operand.vmem [shape: f32[32,1], index: 4, kind: input, shape index: {}]
  %s5 = inlined_call_operand.vmem [shape: bf16[32,160], index: 5, kind: input, shape index: {}]
  %s6 = inlined_call_operand.vmem [shape: f32[32,1], index: 6, kind: input, shape index: {}]
  %s7 = inlined_call_operand.vmem [shape: f32[32,512], index: 7, kind: output, shape index: {}]
  %s8 = sld [smem:[#allocation0]]
  $region118: #{mainblock_forward.1} parent=0
    _
  %s10 = ssub.s32 1, %s8
  %s11 = scalar_select 0, %s10, %s8
  $region1: #{mainblock_forward.1} parent=0
    #allocation3 [shape = 'u8[16384]{0}', space=vmem, size = 0x4000, scoped, tag = 'input window, operand 0']
    #allocation4 [shape = 'u8[65536]{0}', space=vmem, size = 0x10000, scoped, tag = 'output window, operand 0']
    loop: start=0, step=1, limit=4
    $region2: #{mainblock_forward.1} parent=1 // loop_pre_header
      _
    $region3: #{mainblock_forward.1} parent=1 // loop_header
      %s13 = sphi 0, %s17
      %p14 = scmp.ge.s32.totalorder %s13, 4
      %s23 = sphi 0, %s25
      %s26 = sphi 0, %s23
      %s27 = sphi 0, %s26
      %s43 = sphi 0, %s27
      %s47 = sphi 0, %s47
      %s49 = sphi 0, %s47
      %s50 = sphi 0, %s49
      %s64 = sphi 0, %s50
      %s68 = sphi 0, %s68
      %s70 = sphi 0, %s68
      %s71 = sphi 0, %s70
      %s85 = sphi 0, %s71
      %s89 = sphi 0, %s89
      %s91 = sphi 0, %s89
      %s92 = sphi 0, %s91
      %s106 = sphi 0, %s92
      %s110 = sphi 0, %s110
      %s112 = sphi 0, %s110
      %s113 = sphi 0, %s112
      %s127 = sphi 0, %s113
      %s131 = sphi 0, %s131
      %s133 = sphi 0, %s131
      %s134 = sphi 0, %s133
      %s148 = sphi 0, %s134
      %s152 = sphi 0, %s152
      %s154 = sphi 0, %s152
      %s155 = sphi 0, %s154
      %s169 = sphi 0, %s155
      %s175 = sphi 0, %s177
      %s178 = sphi 0, %s175
      %s179 = sphi 0, %s178
      %s195 = sphi 0, %s179
    $region4: #{mainblock_forward.1} parent=1 // loop_header_branch
      %16 = sbr.rel (%p14) target = $region8
    $region5: #{mainblock_forward.1} parent=1 // loop_body
      %s18 = ssub.s32 %s13, 1
      %s19 = ssub.s32 %s13, 2
      %s20 = sadd.s32 %s13, 1
      %s21 = ssub.s32 %s13, %s20
      %p22 = scmp.eq.s32.totalorder %s21, 0
      %s24 = sadd.s32 %s23, 1
      %s25 = scalar_select %p22, %s23, %s24
      %p28 = pneg %p22
      %p29 = scmp.eq.s32.totalorder %s13, 1
      %p30 = por %p28, %p29
      %p31 = scmp.ne.s32.totalorder %s23, %s26
      %p32 = scmp.eq.s32.totalorder %s13, 0
      %p33 = por %p31, %p32
      %p34 = scmp.ne.s32.totalorder %s23, %s26
      %p35 = scmp.eq.s32.totalorder %s18, 1
      %p36 = por %p34, %p35
      %p37 = scmp.ne.s32.totalorder %s26, %s27
      %p38 = scmp.eq.s32.totalorder %s18, 0
      %p39 = por %p37, %p38
      %p40 = scmp.ne.s32.totalorder %s26, %s27
      %p41 = scmp.eq.s32.totalorder %s19, 1
      %p42 = por %p40, %p41
      %p44 = scmp.ne.s32.totalorder %s27, %s43
      %p45 = scmp.eq.s32.totalorder %s19, 0
      %p46 = por %p44, %p45
      %s48 = sadd.s32 %s47, 1
      %p51 = scmp.eq.s32.totalorder %s13, 1
      %p52 = scmp.ne.s32.totalorder %s47, %s49
      %p53 = scmp.eq.s32.totalorder %s13, 0
      %p54 = por %p52, %p53
      %p55 = scmp.ne.s32.totalorder %s47, %s49
      %p56 = scmp.eq.s32.totalorder %s18, 1
      %p57 = por %p55, %p56
      %p58 = scmp.ne.s32.totalorder %s49, %s50
      %p59 = scmp.eq.s32.totalorder %s18, 0
      %p60 = por %p58, %p59
      %p61 = scmp.ne.s32.totalorder %s49, %s50
      %p62 = scmp.eq.s32.totalorder %s19, 1
      %p63 = por %p61, %p62
      %p65 = scmp.ne.s32.totalorder %s50, %s64
      %p66 = scmp.eq.s32.totalorder %s19, 0
      %p67 = por %p65, %p66
      %s69 = sadd.s32 %s68, 1
      %p72 = scmp.eq.s32.totalorder %s13, 1
      %p73 = scmp.ne.s32.totalorder %s68, %s70
      %p74 = scmp.eq.s32.totalorder %s13, 0
      %p75 = por %p73, %p74
      %p76 = scmp.ne.s32.totalorder %s68, %s70
      %p77 = scmp.eq.s32.totalorder %s18, 1
      %p78 = por %p76, %p77
      %p79 = scmp.ne.s32.totalorder %s70, %s71
      %p80 = scmp.eq.s32.totalorder %s18, 0
      %p81 = por %p79, %p80
      %p82 = scmp.ne.s32.totalorder %s70, %s71
      %p83 = scmp.eq.s32.totalorder %s19, 1
      %p84 = por %p82, %p83
      %p86 = scmp.ne.s32.totalorder %s71, %s85
      %p87 = scmp.eq.s32.totalorder %s19, 0
      %p88 = por %p86, %p87
      %s90 = sadd.s32 %s89, 1
      %p93 = scmp.eq.s32.totalorder %s13, 1
      %p94 = scmp.ne.s32.totalorder %s89, %s91
      %p95 = scmp.eq.s32.totalorder %s13, 0
      %p96 = por %p94, %p95
      %p97 = scmp.ne.s32.totalorder %s89, %s91
      %p98 = scmp.eq.s32.totalorder %s18, 1
      %p99 = por %p97, %p98
      %p100 = scmp.ne.s32.totalorder %s91, %s92
      %p101 = scmp.eq.s32.totalorder %s18, 0
      %p102 = por %p100, %p101
      %p103 = scmp.ne.s32.totalorder %s91, %s92
      %p104 = scmp.eq.s32.totalorder %s19, 1
      %p105 = por %p103, %p104
      %p107 = scmp.ne.s32.totalorder %s92, %s106
      %p108 = scmp.eq.s32.totalorder %s19, 0
      %p109 = por %p107, %p108
      %s111 = sadd.s32 %s110, 1
      %p114 = scmp.eq.s32.totalorder %s13, 1
      %p115 = scmp.ne.s32.totalorder %s110, %s112
      %p116 = scmp.eq.s32.totalorder %s13, 0
      %p117 = por %p115, %p116
      %p118 = scmp.ne.s32.totalorder %s110, %s112
      %p119 = scmp.eq.s32.totalorder %s18, 1
      %p120 = por %p118, %p119
      %p121 = scmp.ne.s32.totalorder %s112, %s113
      %p122 = scmp.eq.s32.totalorder %s18, 0
      %p123 = por %p121, %p122
      %p124 = scmp.ne.s32.totalorder %s112, %s113
      %p125 = scmp.eq.s32.totalorder %s19, 1
      %p126 = por %p124, %p125
      %p128 = scmp.ne.s32.totalorder %s113, %s127
      %p129 = scmp.eq.s32.totalorder %s19, 0
      %p130 = por %p128, %p129
      %s132 = sadd.s32 %s131, 1
      %p135 = scmp.eq.s32.totalorder %s13, 1
      %p136 = scmp.ne.s32.totalorder %s131, %s133
      %p137 = scmp.eq.s32.totalorder %s13, 0
      %p138 = por %p136, %p137
      %p139 = scmp.ne.s32.totalorder %s131, %s133
      %p140 = scmp.eq.s32.totalorder %s18, 1
      %p141 = por %p139, %p140
      %p142 = scmp.ne.s32.totalorder %s133, %s134
      %p143 = scmp.eq.s32.totalorder %s18, 0
      %p144 = por %p142, %p143
      %p145 = scmp.ne.s32.totalorder %s133, %s134
      %p146 = scmp.eq.s32.totalorder %s19, 1
      %p147 = por %p145, %p146
      %p149 = scmp.ne.s32.totalorder %s134, %s148
      %p150 = scmp.eq.s32.totalorder %s19, 0
      %p151 = por %p149, %p150
      %s153 = sadd.s32 %s152, 1
      %p156 = scmp.eq.s32.totalorder %s13, 1
      %p157 = scmp.ne.s32.totalorder %s152, %s154
      %p158 = scmp.eq.s32.totalorder %s13, 0
      %p159 = por %p157, %p158
      %p160 = scmp.ne.s32.totalorder %s152, %s154
      %p161 = scmp.eq.s32.totalorder %s18, 1
      %p162 = por %p160, %p161
      %p163 = scmp.ne.s32.totalorder %s154, %s155
      %p164 = scmp.eq.s32.totalorder %s18, 0
      %p165 = por %p163, %p164
      %p166 = scmp.ne.s32.totalorder %s154, %s155
      %p167 = scmp.eq.s32.totalorder %s19, 1
      %p168 = por %p166, %p167
      %p170 = scmp.ne.s32.totalorder %s155, %s169
      %p171 = scmp.eq.s32.totalorder %s19, 0
      %p172 = por %p170, %p171
      %s173 = ssub.s32 %s13, %s20
      %p174 = scmp.eq.s32.totalorder %s173, 0
      %s176 = sadd.s32 %s175, 1
      %s177 = scalar_select %p174, %s175, %s176
      %p180 = pneg %p174
      %p181 = scmp.eq.s32.totalorder %s13, 1
      %p182 = por %p180, %p181
      %p183 = scmp.ne.s32.totalorder %s175, %s178
      %p184 = scmp.eq.s32.totalorder %s13, 0
      %p185 = por %p183, %p184
      %p186 = scmp.ne.s32.totalorder %s175, %s178
      %p187 = scmp.eq.s32.totalorder %s18, 1
      %p188 = por %p186, %p187
      %p189 = scmp.ne.s32.totalorder %s178, %s179
      %p190 = scmp.eq.s32.totalorder %s18, 0
      %p191 = por %p189, %p190
      %p192 = scmp.ne.s32.totalorder %s178, %s179
      %p193 = scmp.eq.s32.totalorder %s19, 1
      %p194 = por %p192, %p193
      %p196 = scmp.ne.s32.totalorder %s179, %s195
      %p197 = scmp.eq.s32.totalorder %s19, 0
      %p198 = por %p196, %p197
      %p199 = scmp.le.s32.totalorder 1, %s13
      %p200 = scmp.lt.s32.totalorder %s13, 3
      %p201 = pnand %p199, %p200
      %p202 = pneg %p201
      // Predicated region
      $region9: #{mainblock_forward.1} parent=5 // pred_check
        _
      $region10: #{mainblock_forward.1} parent=5 // pred_check_branch
        %204 = sbr.rel (%p201) target = $region12
      $region11: #{mainblock_forward.1} parent=5 // pred_region
        %s205 = ssub.s32 %s13, 1
        // Predicated region
        $region13: #{mainblock_forward.1} parent=11 // pred_check
          %p206 = pneg %p60
        $region14: #{mainblock_forward.1} parent=11 // pred_check_branch
          %208 = sbr.rel (%p206) target = $region16
        $region15: #{mainblock_forward.1} parent=11 // pred_region
          _
        $region16: #{mainblock_forward.1} parent=11 // pred_fallthru
          _
        // Predicated region
        $region17: #{mainblock_forward.1} parent=11 // pred_check
          %p209 = pneg %p81
        $region18: #{mainblock_forward.1} parent=11 // pred_check_branch
          %211 = sbr.rel (%p209) target = $region20
        $region19: #{mainblock_forward.1} parent=11 // pred_region
          _
        $region20: #{mainblock_forward.1} parent=11 // pred_fallthru
          _
        // Predicated region
        $region21: #{mainblock_forward.1} parent=11 // pred_check
          %p212 = pneg %p102
        $region22: #{mainblock_forward.1} parent=11 // pred_check_branch
          %214 = sbr.rel (%p212) target = $region24
        $region23: #{mainblock_forward.1} parent=11 // pred_region
          _
        $region24: #{mainblock_forward.1} parent=11 // pred_fallthru
          _
        // Predicated region
        $region25: #{mainblock_forward.1} parent=11 // pred_check
          %p215 = pneg %p123
        $region26: #{mainblock_forward.1} parent=11 // pred_check_branch
          %217 = sbr.rel (%p215) target = $region28
        $region27: #{mainblock_forward.1} parent=11 // pred_region
          _
        $region28: #{mainblock_forward.1} parent=11 // pred_fallthru
          _
        // Predicated region
        $region29: #{mainblock_forward.1} parent=11 // pred_check
          %p218 = pneg %p144
        $region30: #{mainblock_forward.1} parent=11 // pred_check_branch
          %220 = sbr.rel (%p218) target = $region32
        $region31: #{mainblock_forward.1} parent=11 // pred_region
          _
        $region32: #{mainblock_forward.1} parent=11 // pred_fallthru
          _
        // Predicated region
        $region33: #{mainblock_forward.1} parent=11 // pred_check
          %p221 = pneg %p165
        $region34: #{mainblock_forward.1} parent=11 // pred_check_branch
          %223 = sbr.rel (%p221) target = $region36
        $region35: #{mainblock_forward.1} parent=11 // pred_region
          _
        $region36: #{mainblock_forward.1} parent=11 // pred_fallthru
          _
      $region12: #{mainblock_forward.1} parent=5 // pred_fallthru
        _
      %p224 = scmp.lt.s32.totalorder %s13, 2
      // Predicated region
      $region37: #{mainblock_forward.1} parent=5 // pred_check
        %p225 = pneg %p224
      $region38: #{mainblock_forward.1} parent=5 // pred_check_branch
        %227 = sbr.rel (%p225) target = $region40
      $region39: #{mainblock_forward.1} parent=5 // pred_region
        // Predicated region
        $region41: #{mainblock_forward.1} parent=39 // pred_check
          %p228 = pneg %p33
        $region42: #{mainblock_forward.1} parent=39 // pred_check_branch
          %230 = sbr.rel (%p228) target = $region44
        $region43: #{mainblock_forward.1} parent=39 // pred_region
          %s231 = sand.u32 %s23, 1
          %s232 = sand.u32 %s23, 1
          %s233 = smul.addr %s232, 16
          %s234 = scalar_lea.vmem [#allocation3], %s233
          %s235 = smul.u32 2, %s13
          %s236 = smul.addr %s235, 4
          %s237 = scalar_lea.vmem %s0, %s236
          // Predicated region
          $region45: #{mainblock_forward.1} parent=43 // pred_check
            _
          $region46: #{mainblock_forward.1} parent=43 // pred_check_branch
            %239 = sbr.rel (0) target = $region48
          $region47: #{mainblock_forward.1} parent=43 // pred_region
            // Predicated region
            $region49: #{mainblock_forward.1} parent=47 // pred_check
              _
            $region50: #{mainblock_forward.1} parent=47 // pred_check_branch
              %241 = sbr.rel (0) target = $region52
            $region51: #{mainblock_forward.1} parent=47 // pred_region
              // Predicated region
              $region64: #{mainblock_forward.1} parent=51 // pred_check
                _
              $region65: #{mainblock_forward.1} parent=51 // pred_check_branch
                %258 = sbr.rel (0) target = $region67
              $region66: #{mainblock_forward.1} parent=51 // pred_region
                loop: start=0, step=1, limit=1
                $region68: #{mainblock_forward.1} parent=66 // loop_pre_header
                  _
                $region69: #{mainblock_forward.1} parent=66 // loop_header
                  %s260 = sphi 0, %s264
                  %p261 = scmp.ge.s32.totalorder %s260, 1
                  %s265 = sphi %s237, %s237
                  %s266 = sphi %s234, %s234
                $region70: #{mainblock_forward.1} parent=66 // loop_header_branch
                  %263 = sbr.rel (%p261) target = $region74
                $region71: #{mainblock_forward.1} parent=66 // loop_body
                  %v267 = vld [vmem:[%s265] sm:$0xff]
                  %268 = vst [vmem:[%s266] sm:$0xff] %v267
                  %v269 = vld [vmem:[%s265 + $0x10] sm:$0xff]
                  %270 = vst [vmem:[%s266 + $0x8] sm:$0xff] %v269
                $region72: #{mainblock_forward.1} parent=66 // loop_footer
                  %s264 = sadd.s32 1, %s260
                $region73: #{mainblock_forward.1} parent=66 // loop_footer_branch
                  %259 = sbr.rel target = $region69
                $region74: #{mainblock_forward.1} parent=66 // loop_exit
                  _
              $region67: #{mainblock_forward.1} parent=51 // pred_fallthru
                _
              // Predicated region
              $region75: #{mainblock_forward.1} parent=51 // pred_check
                _
              $region76: #{mainblock_forward.1} parent=51 // pred_check_branch
                %272 = sbr.rel target = $region78
              $region77: #{mainblock_forward.1} parent=51 // pred_region
                _
              $region78: #{mainblock_forward.1} parent=51 // pred_fallthru
                _
            $region52: #{mainblock_forward.1} parent=47 // pred_fallthru
              _
            // Predicated region
            $region53: #{mainblock_forward.1} parent=47 // pred_check
              _
            $region54: #{mainblock_forward.1} parent=47 // pred_check_branch
              %243 = sbr.rel target = $region56
            $region55: #{mainblock_forward.1} parent=47 // pred_region
              loop: start=0, step=1, limit=1
              $region57: #{mainblock_forward.1} parent=55 // loop_pre_header
                _
              $region58: #{mainblock_forward.1} parent=55 // loop_header
                %s246 = sphi 0, %s250
                %p247 = scmp.ge.s32.totalorder %s246, 1
                %s251 = sphi %s237, %s237
                %s252 = sphi %s234, %s234
              $region59: #{mainblock_forward.1} parent=55 // loop_header_branch
                %249 = sbr.rel (%p247) target = $region63
              $region60: #{mainblock_forward.1} parent=55 // loop_body
                %v253 = vld [vmem:[%s251] sm:$0xff]
                %254 = vst [vmem:[%s252] sm:$0xff] %v253
                %v255 = vld [vmem:[%s251 + $0x10] sm:$0xff]
                %256 = vst [vmem:[%s252 + $0x8] sm:$0xff] %v255
              $region61: #{mainblock_forward.1} parent=55 // loop_footer
                %s250 = sadd.s32 1, %s246
              $region62: #{mainblock_forward.1} parent=55 // loop_footer_branch
                %245 = sbr.rel target = $region58
              $region63: #{mainblock_forward.1} parent=55 // loop_exit
                _
            $region56: #{mainblock_forward.1} parent=47 // pred_fallthru
              _
          $region48: #{mainblock_forward.1} parent=43 // pred_fallthru
            _
          %273 = vnop
        $region44: #{mainblock_forward.1} parent=39 // pred_fallthru
          _
      $region40: #{mainblock_forward.1} parent=5 // pred_fallthru
        _
      %p274 = scmp.le.s32.totalorder 1, %s13
      %p275 = scmp.lt.s32.totalorder %s13, 3
      %p276 = pnand %p274, %p275
      %p277 = pneg %p276
      // Predicated region
      $region79: #{mainblock_forward.1} parent=5 // pred_check
        _
      $region80: #{mainblock_forward.1} parent=5 // pred_check_branch
        %279 = sbr.rel (%p276) target = $region82
      $region81: #{mainblock_forward.1} parent=5 // pred_region
        %s280 = ssub.s32 %s13, 1
        %s281 = sand.u32 %s26, 1
        %s282 = sand.u32 %s26, 1
        %s283 = smul.addr %s282, 16
        %s284 = scalar_lea.vmem [#allocation3], %s283
        // Predicated region
        $region83: #{mainblock_forward.1} parent=81 // pred_check
          %p285 = pneg %p39
        $region84: #{mainblock_forward.1} parent=81 // pred_check_branch
          %287 = sbr.rel (%p285) target = $region86
        $region85: #{mainblock_forward.1} parent=81 // pred_region
          _
        $region86: #{mainblock_forward.1} parent=81 // pred_fallthru
          _
        %s288 = sand.u32 %s26, 1
        %s289 = sand.u32 %s26, 1
        %s290 = smul.addr %s289, 16
        %s291 = scalar_lea.vmem [#allocation3], %s290
        %p292 = pneg %p39
        %p293 = pneg %p36
        %p294 = pneg %p60
        %p295 = pneg %p57
        %p296 = pneg %p81
        %p297 = pneg %p78
        %p298 = pneg %p102
        %p299 = pneg %p99
        %p300 = pneg %p123
        %p301 = pneg %p120
        %p302 = pneg %p144
        %p303 = pneg %p141
        %p304 = pneg %p165
        %p305 = pneg %p162
        %p306 = pneg %p191
        %p307 = pneg %p188
        %s308 = sand.u32 %s178, 1
        %s309 = sand.u32 %s178, 1
        %s310 = smul.addr %s309, 64
        %s311 = scalar_lea.vmem [#allocation4], %s310
        %s312 = smul.u32 2, %s18
        %s313 = smul.u32 2, %s18
        %v315 = vld [vmem:[%s284] sm:$0xff]
        %v316 = vld [vmem:[%s284 + $0x8] sm:$0xff]
        %v317 = vld [vmem:[%s1] sm:$0xf]
        %v318 = vld [vmem:[%s1 + $0x4] sm:$0xf]
        %v319 = vld [vmem:[%s1 + $0x8] sm:$0xf]
        %v320 = vld [vmem:[%s1 + $0xc] sm:$0xf]
        %v321 = vld [vmem:[%s2] sm:$0xff]
        %v322 = vld [vmem:[%s2 + $0x8] sm:$0xff]
        %v323 = vld [vmem:[%s2 + $0x10] sm:$0xff]
        %v324 = vld [vmem:[%s2 + $0x18] sm:$0xff]
        %326 = vset.pattern.permute.xlu0 0
        %327 = vperm.xlu0 %326, %v321
        %v328 = vpop.permute.xlu0 %327
        %331 = vset.pattern.permute.xlu0 0
        %332 = vperm.xlu0 %331, %v322
        %v333 = vpop.permute.xlu0 %332
        %336 = vset.pattern.permute.xlu0 0
        %337 = vperm.xlu0 %336, %v323
        %v338 = vpop.permute.xlu0 %337
        %341 = vset.pattern.permute.xlu0 0
        %342 = vperm.xlu0 %341, %v324
        %v343 = vpop.permute.xlu0 %342
        %v349 = vunpack.c.l.b16 %v317
        %v350 = vunpack.c.l.b16 %v318
        %v351 = vunpack.c.l.b16 %v319
        %v352 = vunpack.c.l.b16 %v320
        %v353 = vpack.c.b16 %v350, %v349
        %v354 = vpack.c.b16 %v352, %v351
        %v357 = vunpack.c.l.b16 %v315
        %v358 = vunpack.c.h.b16 %v315
        %v359 = vunpack.c.l.b16 %v316
        %v360 = vunpack.c.h.b16 %v316
        %v361 = vpack.c.b16 %v359, %v357
        %v362 = vpack.c.b16 %v360, %v358
        %vm365 = vcmask 130048
        %v367 = vsel %vm365, %v353, 0
        %v370 = vsel %vm365, %v354, 0
        %372 = vmatprep.subr.bf16.mxu0 %v362
        %373 = vmatpush1.bf16.msra.mxu0 %v361
        %374 = vmatprep.subr.bf16.mxu0 0
        %375 = vmatpush1.bf16.msra.mxu0 0
        %376 = vmatprep.subr.bf16.mxu0 0
        %377 = vmatpush1.bf16.msra.mxu0 0
        %378 = vmatprep.subr.bf16.mxu0 0
        %379 = vmatpush1.bf16.msra.mxu0 0
        %380 = vmatprep.subr.bf16.mxu0 0
        %381 = vmatpush1.bf16.msra.mxu0 0
        %382 = vmatprep.subr.bf16.mxu0 0
        %383 = vmatpush1.bf16.msra.mxu0 0
        %384 = vmatprep.subr.bf16.mxu0 0
        %385 = vmatpush1.bf16.msra.mxu0 0
        %386 = vmatprep.subr.bf16.mxu0 0
        %387 = vmatpush1.bf16.msra.mxu0 0
        %388 = vmatprep.subr.bf16.mxu0 0
        %389 = vmatpush1.bf16.msra.mxu0 0
        %390 = vmatprep.subr.bf16.mxu0 0
        %391 = vmatpush1.bf16.msra.mxu0 0
        %392 = vmatprep.subr.bf16.mxu0 0
        %393 = vmatpush1.bf16.msra.mxu0 0
        %394 = vmatprep.subr.bf16.mxu0 0
        %395 = vmatpush1.bf16.msra.mxu0 0
        %396 = vmatprep.subr.bf16.mxu0 0
        %397 = vmatpush1.bf16.msra.mxu0 0
        %398 = vmatprep.subr.bf16.mxu0 0
        %399 = vmatpush1.bf16.msra.mxu0 0
        %400 = vmatprep.subr.bf16.mxu0 0
        %401 = vmatpush1.bf16.msra.mxu0 0
        %402 = vmatprep.subr.bf16.mxu0 0
        %403 = vmatpush1.bf16.msra.mxu0 0
        %404 = vmatprep.mubr.bf16.mxu0 0
        %405 = vmatmul.mubr.bf16.gmra.mrb[0].mxu0 %v367
        %v406 = vpop.f32.mrb[0].mxu0
        %v407 = vadd.f32 %v328, %v406
        %v408 = vpop.f32.mrb[0].mxu0
        %v409 = vadd.f32 %v328, %v408
        %v410 = vpop.f32.mrb[0].mxu0
        %v411 = vadd.f32 %v333, %v410
        %v412 = vpop.f32.mrb[0].mxu0
        %v413 = vadd.f32 %v333, %v412
        %414 = vmatprep.mubr.bf16.mxu0 0
        %415 = vmatmul.mubr.bf16.gmra.mrb[0].mxu0 %v370
        %v416 = vpop.f32.mrb[0].mxu0
        %v417 = vadd.f32 %v338, %v416
        %v418 = vpop.f32.mrb[0].mxu0
        %v419 = vadd.f32 %v338, %v418
        %v420 = vpop.f32.mrb[0].mxu0
        %v421 = vadd.f32 %v343, %v420
        %v422 = vpop.f32.mrb[0].mxu0
        %v423 = vadd.f32 %v343, %v422
        %424 = vdwg.mxu0
        %425 = vst [vmem:[#allocation2] sm:$0xff] %v407
        %426 = vst [vmem:[#allocation2 + $0x8] sm:$0xff] %v409
        %427 = vst [vmem:[#allocation2 + $0x10] sm:$0xff] %v411
        %428 = vst [vmem:[#allocation2 + $0x18] sm:$0xff] %v413
        %429 = vst [vmem:[#allocation2 + $0x20] sm:$0xff] %v417
        %430 = vst [vmem:[#allocation2 + $0x28] sm:$0xff] %v419
        %431 = vst [vmem:[#allocation2 + $0x30] sm:$0xff] %v421
        %432 = vst [vmem:[#allocation2 + $0x38] sm:$0xff] %v423
        %v433 = vunpack.c.l.bf16 %v315
        %v434 = vunpack.c.h.bf16 %v315
        %v435 = vunpack.c.l.bf16 %v316
        %v436 = vunpack.c.h.bf16 %v316
        %v437 = vld [vmem:[%s3] sm:$0xf]
        %v438 = vld [vmem:[%s3 + $0x4] sm:$0xf]
        %v439 = vld [vmem:[%s3 + $0x8] sm:$0xf]
        %v440 = vld [vmem:[%s3 + $0xc] sm:$0xf]
        %v441 = vld [vmem:[%s4] sm:$0xff]
        %v442 = vld [vmem:[%s4 + $0x8] sm:$0xff]
        %v443 = vld [vmem:[%s4 + $0x10] sm:$0xff]
        %v444 = vld [vmem:[%s4 + $0x18] sm:$0xff]
        %v445 = vlaneseq
        %v446 = vand.u32 %v445, 127
        %v447 = vadd.s32 %v446, 128
        %vm448 = vcmp.lt.s32.totalorder %v446, 0
        %v449 = vsub.s32 0, %v446
        %v450 = vsel %vm448, %v449, %v446
        %v451 = vshrl.u32 %v450, 7
        %v452 = vand.u32 %v450, 127
        %v453 = vsub.s32 0, %v452
        %v454 = vsel %vm448, %v453, %v452
        %vm455 = vcmp.lt.s32.totalorder %v447, 0
        %v456 = vsub.s32 0, %v447
        %v457 = vsel %vm455, %v456, %v447
        %v458 = vshrl.u32 %v457, 7
        %v459 = vand.u32 %v457, 127
        %v460 = vsub.s32 0, %v459
        %v461 = vsel %vm455, %v460, %v459
        %vm462 = vcmp.ne.s32.totalorder %v454, 0
        %vm463 = vcmp.ne.s32.totalorder %v461, 0
        %vm464 = vcmp.lt.s32.totalorder %v454, 0
        %vm465 = vcmp.lt.s32.totalorder %v461, 0
        %vm466 = vmand %vm464, %vm462
        %vm467 = vmand %vm465, %vm463
        %v468 = vadd.s32 %v454, 128
        %v469 = vadd.s32 %v461, 128
        %v470 = vsel %vm466, %v468, %v454
        %v471 = vsel %vm467, %v469, %v461
        %472 = vrot.lane.b32.xlu0 %v433, 2
        %v473 = vpop.permute.xlu0 %472
        %474 = vrot.lane.b32.xlu0 %v435, 2
        %v475 = vpop.permute.xlu0 %474
        %476 = vrot.lane.b32.xlu0 %v434, 2
        %v477 = vpop.permute.xlu0 %476
        %478 = vrot.lane.b32.xlu0 %v436, 2
        %v479 = vpop.permute.xlu0 %478
        %vm480 = vcmp.lt.s32.totalorder %v446, 2
        %v481 = vsel %vm480, %v473, %v477
        %v482 = vsel %vm480, %v475, %v479
        %v483 = vsel %vm480, %v477, %v473
        %v484 = vsel %vm480, %v479, %v475
        %vm485 = vcmp.ge.s32.totalorder %v470, 2
        %vm486 = vcmp.ge.s32.totalorder %v471, 2
        %v487 = vsel %vm485, 1, 0
        %v488 = vsel %vm486, 1, 0
        %vm489 = vcmp.eq.s32.totalorder %v487, 1
        %vm490 = vcmp.eq.s32.totalorder %v488, 1
        %v491 = vsel %vm489, %v483, 0.0
        %v492 = vsel %vm490, %v481, 0.0
        %v493 = vsel %vm489, %v484, 0.0
        %v494 = vsel %vm490, %v482, 0.0
        %495 = vrot.lane.b32.xlu0 %v433, 1
        %v496 = vpop.permute.xlu0 %495
        %497 = vrot.lane.b32.xlu0 %v435, 1
        %v498 = vpop.permute.xlu0 %497
        %499 = vrot.lane.b32.xlu0 %v434, 1
        %v500 = vpop.permute.xlu0 %499
        %501 = vrot.lane.b32.xlu0 %v436, 1
        %v502 = vpop.permute.xlu0 %501
        %vm503 = vcmp.lt.s32.totalorder %v446, 1
        %v504 = vsel %vm503, %v496, %v500
        %v505 = vsel %vm503, %v498, %v502
        %v506 = vsel %vm503, %v500, %v496
        %v507 = vsel %vm503, %v502, %v498
        %vm508 = vcmp.ge.s32.totalorder %v470, 1
        %vm509 = vcmp.ge.s32.totalorder %v471, 1
        %v510 = vsel %vm508, 1, 0
        %v511 = vsel %vm509, 1, 0
        %vm512 = vcmp.eq.s32.totalorder %v510, 1
        %vm513 = vcmp.eq.s32.totalorder %v511, 1
        %v514 = vsel %vm512, %v506, 0.0
        %v515 = vsel %vm513, %v504, 0.0
        %v516 = vsel %vm512, %v507, 0.0
        %v517 = vsel %vm513, %v505, 0.0
        %518 = vrot.lane.b32.xlu0 %v433, 127
        %v519 = vpop.permute.xlu0 %518
        %520 = vrot.lane.b32.xlu0 %v435, 127
        %v521 = vpop.permute.xlu0 %520
        %522 = vrot.lane.b32.xlu0 %v434, 127
        %v523 = vpop.permute.xlu0 %522
        %524 = vrot.lane.b32.xlu0 %v436, 127
        %v525 = vpop.permute.xlu0 %524
        %vm526 = vcmp.lt.s32.totalorder %v446, 127
        %v527 = vsel %vm526, %v519, %v523
        %v528 = vsel %vm526, %v521, %v525
        %v529 = vsel %vm526, %v523, %v519
        %v530 = vsel %vm526, %v525, %v521
        %vm531 = vcmp.lt.s32.totalorder %v470, 127
        %vm532 = vcmp.lt.s32.totalorder %v471, 127
        %v533 = vsel %vm531, 1, 0
        %v534 = vsel %vm532, 1, 0
        %vm535 = vcmp.eq.s32.totalorder %v533, 1
        %vm536 = vcmp.eq.s32.totalorder %v534, 1
        %v537 = vsel %vm535, %v527, 0.0
        %v538 = vsel %vm536, %v529, 0.0
        %v539 = vsel %vm535, %v528, 0.0
        %v540 = vsel %vm536, %v530, 0.0
        %541 = vrot.lane.b32.xlu0 %v433, 126
        %v542 = vpop.permute.xlu0 %541
        %543 = vrot.lane.b32.xlu0 %v435, 126
        %v544 = vpop.permute.xlu0 %543
        %545 = vrot.lane.b32.xlu0 %v434, 126
        %v546 = vpop.permute.xlu0 %545
        %547 = vrot.lane.b32.xlu0 %v436, 126
        %v548 = vpop.permute.xlu0 %547
        %vm549 = vcmp.lt.s32.totalorder %v446, 126
        %v550 = vsel %vm549, %v542, %v546
        %v551 = vsel %vm549, %v544, %v548
        %v552 = vsel %vm549, %v546, %v542
        %v553 = vsel %vm549, %v548, %v544
        %vm554 = vcmp.lt.s32.totalorder %v470, 126
        %vm555 = vcmp.lt.s32.totalorder %v471, 126
        %v556 = vsel %vm554, 1, 0
        %v557 = vsel %vm555, 1, 0
        %vm558 = vcmp.eq.s32.totalorder %v556, 1
        %vm559 = vcmp.eq.s32.totalorder %v557, 1
        %v560 = vsel %vm558, %v550, 0.0
        %v561 = vsel %vm559, %v552, 0.0
        %v562 = vsel %vm558, %v551, 0.0
        %v563 = vsel %vm559, %v553, 0.0
        %v564 = vpack.c.bf16 %v493, %v491
        %v565 = vpack.c.bf16 %v494, %v492
        %v566 = vpack.c.bf16 %v516, %v514
        %v567 = vpack.c.bf16 %v517, %v515
        %v568 = vpack.c.bf16 %v435, %v433
        %v569 = vpack.c.bf16 %v436, %v434
        %v570 = vpack.c.bf16 %v539, %v537
        %v571 = vpack.c.bf16 %v540, %v538
        %v572 = vpack.c.bf16 %v562, %v560
        %v573 = vpack.c.bf16 %v563, %v561
        %575 = vset.pattern.permute.xlu0 0
        %576 = vperm.xlu0 %575, %v441
        %v577 = vpop.permute.xlu0 %576
        %580 = vset.pattern.permute.xlu0 0
        %581 = vperm.xlu0 %580, %v442
        %v582 = vpop.permute.xlu0 %581
        %585 = vset.pattern.permute.xlu0 0
        %586 = vperm.xlu0 %585, %v443
        %v587 = vpop.permute.xlu0 %586
        %590 = vset.pattern.permute.xlu0 0
        %591 = vperm.xlu0 %590, %v444
        %v592 = vpop.permute.xlu0 %591
        %v598 = vunpack.c.l.b16 %v437
        %v599 = vunpack.c.l.b16 %v438
        %v600 = vunpack.c.l.b16 %v439
        %v601 = vunpack.c.l.b16 %v440
        %v602 = vpack.c.b16 %v599, %v598
        %v603 = vpack.c.b16 %v601, %v600
        %vm604 = vcmask 654336
        %v606 = vsel %vm604, %v602, 0
        %v609 = vsel %vm604, %v603, 0
        %611 = vmatprep.subr.bf16.mxu0 %v565
        %612 = vmatpush1.bf16.msra.mxu0 %v564
        %613 = vmatprep.subr.bf16.mxu0 %v567
        %614 = vmatpush1.bf16.msra.mxu0 %v566
        %615 = vmatprep.subr.bf16.mxu0 %v569
        %616 = vmatpush1.bf16.msra.mxu0 %v568
        %617 = vmatprep.subr.bf16.mxu0 %v571
        %618 = vmatpush1.bf16.msra.mxu0 %v570
        %619 = vmatprep.subr.bf16.mxu0 %v573
        %620 = vmatpush1.bf16.msra.mxu0 %v572
        %621 = vmatprep.subr.bf16.mxu0 0
        %622 = vmatpush1.bf16.msra.mxu0 0
        %623 = vmatprep.subr.bf16.mxu0 0
        %624 = vmatpush1.bf16.msra.mxu0 0
        %625 = vmatprep.subr.bf16.mxu0 0
        %626 = vmatpush1.bf16.msra.mxu0 0
        %627 = vmatprep.subr.bf16.mxu0 0
        %628 = vmatpush1.bf16.msra.mxu0 0
        %629 = vmatprep.subr.bf16.mxu0 0
        %630 = vmatpush1.bf16.msra.mxu0 0
        %631 = vmatprep.subr.bf16.mxu0 0
        %632 = vmatpush1.bf16.msra.mxu0 0
        %633 = vmatprep.subr.bf16.mxu0 0
        %634 = vmatpush1.bf16.msra.mxu0 0
        %635 = vmatprep.subr.bf16.mxu0 0
        %636 = vmatpush1.bf16.msra.mxu0 0
        %637 = vmatprep.subr.bf16.mxu0 0
        %638 = vmatpush1.bf16.msra.mxu0 0
        %639 = vmatprep.subr.bf16.mxu0 0
        %640 = vmatpush1.bf16.msra.mxu0 0
        %641 = vmatprep.subr.bf16.mxu0 0
        %642 = vmatpush1.bf16.msra.mxu0 0
        %643 = vmatprep.mubr.bf16.mxu0 0
        %644 = vmatmul.mubr.bf16.gmra.mrb[0].mxu0 %v606
        %v645 = vpop.f32.mrb[0].mxu0
        %v646 = vadd.f32 %v577, %v645
        %v647 = vpop.f32.mrb[0].mxu0
        %v648 = vadd.f32 %v577, %v647
        %v649 = vpop.f32.mrb[0].mxu0
        %v650 = vadd.f32 %v582, %v649
        %v651 = vpop.f32.mrb[0].mxu0
        %v652 = vadd.f32 %v582, %v651
        %653 = vmatprep.mubr.bf16.mxu0 0
        %654 = vmatmul.mubr.bf16.gmra.mrb[0].mxu0 %v609
        %v655 = vpop.f32.mrb[0].mxu0
        %v656 = vadd.f32 %v587, %v655
        %v657 = vpop.f32.mrb[0].mxu0
        %v658 = vadd.f32 %v587, %v657
        %v659 = vpop.f32.mrb[0].mxu0
        %v660 = vadd.f32 %v592, %v659
        %v661 = vpop.f32.mrb[0].mxu0
        %v662 = vadd.f32 %v592, %v661
        %663 = vdwg.mxu0
        %v664 = vmax.f32 %v646, 0.0
        %v665 = vmax.f32 %v648, 0.0
        %v666 = vmax.f32 %v650, 0.0
        %v667 = vmax.f32 %v652, 0.0
        %v668 = vmax.f32 %v656, 0.0
        %v669 = vmax.f32 %v658, 0.0
        %v670 = vmax.f32 %v660, 0.0
        %v671 = vmax.f32 %v662, 0.0
        %v672 = vld [vmem:[%s5] sm:$0xff]
        %v673 = vld [vmem:[%s5 + $0x8] sm:$0xff]
        %v674 = vld [vmem:[%s5 + $0x10] sm:$0xff]
        %v675 = vld [vmem:[%s5 + $0x18] sm:$0xff]
        %v676 = vld [vmem:[%s6] sm:$0xff]
        %v677 = vld [vmem:[%s6 + $0x8] sm:$0xff]
        %v678 = vld [vmem:[%s6 + $0x10] sm:$0xff]
        %v679 = vld [vmem:[%s6 + $0x18] sm:$0xff]
        %680 = vrot.lane.b32.xlu0 %v664, 2
        %v681 = vpop.permute.xlu0 %680
        %682 = vrot.lane.b32.xlu0 %v666, 2
        %v683 = vpop.permute.xlu0 %682
        %684 = vrot.lane.b32.xlu0 %v668, 2
        %v685 = vpop.permute.xlu0 %684
        %686 = vrot.lane.b32.xlu0 %v670, 2
        %v687 = vpop.permute.xlu0 %686
        %688 = vrot.lane.b32.xlu0 %v665, 2
        %v689 = vpop.permute.xlu0 %688
        %690 = vrot.lane.b32.xlu0 %v667, 2
        %v691 = vpop.permute.xlu0 %690
        %692 = vrot.lane.b32.xlu0 %v669, 2
        %v693 = vpop.permute.xlu0 %692
        %694 = vrot.lane.b32.xlu0 %v671, 2
        %v695 = vpop.permute.xlu0 %694
        %v696 = vsel %vm480, %v681, %v689
        %v697 = vsel %vm480, %v683, %v691
        %v698 = vsel %vm480, %v685, %v693
        %v699 = vsel %vm480, %v687, %v695
        %v700 = vsel %vm480, %v689, %v681
        %v701 = vsel %vm480, %v691, %v683
        %v702 = vsel %vm480, %v693, %v685
        %v703 = vsel %vm480, %v695, %v687
        %v704 = vsel %vm489, %v700, 0.0
        %v705 = vsel %vm490, %v696, 0.0
        %v706 = vsel %vm489, %v701, 0.0
        %v707 = vsel %vm490, %v697, 0.0
        %v708 = vsel %vm489, %v702, 0.0
        %v709 = vsel %vm490, %v698, 0.0
        %v710 = vsel %vm489, %v703, 0.0
        %v711 = vsel %vm490, %v699, 0.0
        %712 = vrot.lane.b32.xlu0 %v664, 1
        %v713 = vpop.permute.xlu0 %712
        %714 = vrot.lane.b32.xlu0 %v666, 1
        %v715 = vpop.permute.xlu0 %714
        %716 = vrot.lane.b32.xlu0 %v668, 1
        %v717 = vpop.permute.xlu0 %716
        %718 = vrot.lane.b32.xlu0 %v670, 1
        %v719 = vpop.permute.xlu0 %718
        %720 = vrot.lane.b32.xlu0 %v665, 1
        %v721 = vpop.permute.xlu0 %720
        %722 = vrot.lane.b32.xlu0 %v667, 1
        %v723 = vpop.permute.xlu0 %722
        %724 = vrot.lane.b32.xlu0 %v669, 1
        %v725 = vpop.permute.xlu0 %724
        %726 = vrot.lane.b32.xlu0 %v671, 1
        %v727 = vpop.permute.xlu0 %726
        %v728 = vsel %vm503, %v713, %v721
        %v729 = vsel %vm503, %v715, %v723
        %v730 = vsel %vm503, %v717, %v725
        %v731 = vsel %vm503, %v719, %v727
        %v732 = vsel %vm503, %v721, %v713
        %v733 = vsel %vm503, %v723, %v715
        %v734 = vsel %vm503, %v725, %v717
        %v735 = vsel %vm503, %v727, %v719
        %v736 = vsel %vm512, %v732, 0.0
        %v737 = vsel %vm513, %v728, 0.0
        %v738 = vsel %vm512, %v733, 0.0
        %v739 = vsel %vm513, %v729, 0.0
        %v740 = vsel %vm512, %v734, 0.0
        %v741 = vsel %vm513, %v730, 0.0
        %v742 = vsel %vm512, %v735, 0.0
        %v743 = vsel %vm513, %v731, 0.0
        %744 = vrot.lane.b32.xlu0 %v664, 127
        %v745 = vpop.permute.xlu0 %744
        %746 = vrot.lane.b32.xlu0 %v666, 127
        %v747 = vpop.permute.xlu0 %746
        %748 = vrot.lane.b32.xlu0 %v668, 127
        %v749 = vpop.permute.xlu0 %748
        %750 = vrot.lane.b32.xlu0 %v670, 127
        %v751 = vpop.permute.xlu0 %750
        %752 = vrot.lane.b32.xlu0 %v665, 127
        %v753 = vpop.permute.xlu0 %752
        %754 = vrot.lane.b32.xlu0 %v667, 127
        %v755 = vpop.permute.xlu0 %754
        %756 = vrot.lane.b32.xlu0 %v669, 127
        %v757 = vpop.permute.xlu0 %756
        %758 = vrot.lane.b32.xlu0 %v671, 127
        %v759 = vpop.permute.xlu0 %758
        %v760 = vsel %vm526, %v745, %v753
        %v761 = vsel %vm526, %v747, %v755
        %v762 = vsel %vm526, %v749, %v757
        %v763 = vsel %vm526, %v751, %v759
        %v764 = vsel %vm526, %v753, %v745
        %v765 = vsel %vm526, %v755, %v747
        %v766 = vsel %vm526, %v757, %v749
        %v767 = vsel %vm526, %v759, %v751
        %v768 = vsel %vm535, %v760, 0.0
        %v769 = vsel %vm536, %v764, 0.0
        %v770 = vsel %vm535, %v761, 0.0
        %v771 = vsel %vm536, %v765, 0.0
        %v772 = vsel %vm535, %v762, 0.0
        %v773 = vsel %vm536, %v766, 0.0
        %v774 = vsel %vm535, %v763, 0.0
        %v775 = vsel %vm536, %v767, 0.0
        %776 = vrot.lane.b32.xlu0 %v664, 126
        %v777 = vpop.permute.xlu0 %776
        %778 = vrot.lane.b32.xlu0 %v666, 126
        %v779 = vpop.permute.xlu0 %778
        %780 = vrot.lane.b32.xlu0 %v668, 126
        %v781 = vpop.permute.xlu0 %780
        %782 = vrot.lane.b32.xlu0 %v670, 126
        %v783 = vpop.permute.xlu0 %782
        %784 = vrot.lane.b32.xlu0 %v665, 126
        %v785 = vpop.permute.xlu0 %784
        %786 = vrot.lane.b32.xlu0 %v667, 126
        %v787 = vpop.permute.xlu0 %786
        %788 = vrot.lane.b32.xlu0 %v669, 126
        %v789 = vpop.permute.xlu0 %788
        %790 = vrot.lane.b32.xlu0 %v671, 126
        %v791 = vpop.permute.xlu0 %790
        %v792 = vsel %vm549, %v777, %v785
        %v793 = vsel %vm549, %v779, %v787
        %v794 = vsel %vm549, %v781, %v789
        %v795 = vsel %vm549, %v783, %v791
        %v796 = vsel %vm549, %v785, %v777
        %v797 = vsel %vm549, %v787, %v779
        %v798 = vsel %vm549, %v789, %v781
        %v799 = vsel %vm549, %v791, %v783
        %v800 = vsel %vm558, %v792, 0.0
        %v801 = vsel %vm559, %v796, 0.0
        %v802 = vsel %vm558, %v793, 0.0
        %v803 = vsel %vm559, %v797, 0.0
        %v804 = vsel %vm558, %v794, 0.0
        %v805 = vsel %vm559, %v798, 0.0
        %v806 = vsel %vm558, %v795, 0.0
        %v807 = vsel %vm559, %v799, 0.0
        %v808 = vpack.c.bf16 %v706, %v704
        %v809 = vpack.c.bf16 %v707, %v705
        %v810 = vpack.c.bf16 %v710, %v708
        %v811 = vpack.c.bf16 %v711, %v709
        %v812 = vpack.c.bf16 %v738, %v736
        %v813 = vpack.c.bf16 %v739, %v737
        %v814 = vpack.c.bf16 %v742, %v740
        %v815 = vpack.c.bf16 %v743, %v741
        %v816 = vpack.c.bf16 %v666, %v664
        %v817 = vpack.c.bf16 %v667, %v665
        %v818 = vpack.c.bf16 %v670, %v668
        %v819 = vpack.c.bf16 %v671, %v669
        %v820 = vpack.c.bf16 %v770, %v768
        %v821 = vpack.c.bf16 %v771, %v769
        %v822 = vpack.c.bf16 %v774, %v772
        %v823 = vpack.c.bf16 %v775, %v773
        %v824 = vpack.c.bf16 %v802, %v800
        %v825 = vpack.c.bf16 %v803, %v801
        %v826 = vpack.c.bf16 %v806, %v804
        %v827 = vpack.c.bf16 %v807, %v805
        %829 = vset.pattern.permute.xlu0 0
        %830 = vperm.xlu0 %829, %v676
        %v831 = vpop.permute.xlu0 %830
        %834 = vset.pattern.permute.xlu0 0
        %835 = vperm.xlu0 %834, %v677
        %v836 = vpop.permute.xlu0 %835
        %839 = vset.pattern.permute.xlu0 0
        %840 = vperm.xlu0 %839, %v678
        %v841 = vpop.permute.xlu0 %840
        %844 = vset.pattern.permute.xlu0 0
        %845 = vperm.xlu0 %844, %v679
        %v846 = vpop.permute.xlu0 %845
        %v852 = vunpack.c.l.b16 %v672
        %v853 = vunpack.c.h.b16 %v672
        %v854 = vunpack.c.l.b16 %v673
        %v855 = vunpack.c.h.b16 %v673
        %v856 = vunpack.c.l.b16 %v674
        %v857 = vunpack.c.h.b16 %v674
        %v858 = vunpack.c.l.b16 %v675
        %v859 = vunpack.c.h.b16 %v675
        %v860 = vpack.c.b16 %v854, %v852
        %v861 = vpack.c.b16 %v855, %v853
        %v862 = vpack.c.b16 %v858, %v856
        %v863 = vpack.c.b16 %v859, %v857
        %vm866 = vcmask 261120
        %v868 = vsel %vm866, %v861, 0
        %v871 = vsel %vm866, %v863, 0
        %873 = vmatprep.subr.bf16.mxu0 %v809
        %874 = vmatpush1.bf16.msra.mxu0 %v808
        %875 = vmatprep.subr.bf16.mxu0 %v811
        %876 = vmatpush1.bf16.msra.mxu0 %v810
        %877 = vmatprep.subr.bf16.mxu0 %v813
        %878 = vmatpush1.bf16.msra.mxu0 %v812
        %879 = vmatprep.subr.bf16.mxu0 %v815
        %880 = vmatpush1.bf16.msra.mxu0 %v814
        %881 = vmatprep.subr.bf16.mxu0 %v817
        %882 = vmatpush1.bf16.msra.mxu0 %v816
        %883 = vmatprep.subr.bf16.mxu0 %v819
        %884 = vmatpush1.bf16.msra.mxu0 %v818
        %885 = vmatprep.subr.bf16.mxu0 %v821
        %886 = vmatpush1.bf16.msra.mxu0 %v820
        %887 = vmatprep.subr.bf16.mxu0 %v823
        %888 = vmatpush1.bf16.msra.mxu0 %v822
        %889 = vmatprep.subr.bf16.mxu0 %v825
        %890 = vmatpush1.bf16.msra.mxu0 %v824
        %891 = vmatprep.subr.bf16.mxu0 %v827
        %892 = vmatpush1.bf16.msra.mxu0 %v826
        %893 = vmatprep.subr.bf16.mxu0 0
        %894 = vmatpush1.bf16.msra.mxu0 0
        %895 = vmatprep.subr.bf16.mxu0 0
        %896 = vmatpush1.bf16.msra.mxu0 0
        %897 = vmatprep.subr.bf16.mxu0 0
        %898 = vmatpush1.bf16.msra.mxu0 0
        %899 = vmatprep.subr.bf16.mxu0 0
        %900 = vmatpush1.bf16.msra.mxu0 0
        %901 = vmatprep.subr.bf16.mxu0 0
        %902 = vmatpush1.bf16.msra.mxu0 0
        %903 = vmatprep.subr.bf16.mxu0 0
        %904 = vmatpush1.bf16.msra.mxu0 0
        %905 = vmatprep.mubr.bf16.mxu0 %v868
        %906 = vmatmul.mubr.bf16.gmra.mrb[0].mxu0 %v860
        %v907 = vpop.f32.mrb[0].mxu0
        %v908 = vadd.f32 %v831, %v907
        %v909 = vpop.f32.mrb[0].mxu0
        %v910 = vadd.f32 %v831, %v909
        %v911 = vpop.f32.mrb[0].mxu0
        %v912 = vadd.f32 %v836, %v911
        %v913 = vpop.f32.mrb[0].mxu0
        %v914 = vadd.f32 %v836, %v913
        %915 = vmatprep.mubr.bf16.mxu0 %v871
        %916 = vmatmul.mubr.bf16.gmra.mrb[0].mxu0 %v862
        %v917 = vpop.f32.mrb[0].mxu0
        %v918 = vadd.f32 %v841, %v917
        %v919 = vpop.f32.mrb[0].mxu0
        %v920 = vadd.f32 %v841, %v919
        %v921 = vpop.f32.mrb[0].mxu0
        %v922 = vadd.f32 %v846, %v921
        %v923 = vpop.f32.mrb[0].mxu0
        %v924 = vadd.f32 %v846, %v923
        %925 = vdwg.mxu0
        %v926 = vld [vmem:[#allocation2] sm:$0xff]
        %v927 = vld [vmem:[#allocation2 + $0x8] sm:$0xff]
        %v928 = vld [vmem:[#allocation2 + $0x10] sm:$0xff]
        %v929 = vld [vmem:[#allocation2 + $0x18] sm:$0xff]
        %v930 = vld [vmem:[#allocation2 + $0x20] sm:$0xff]
        %v931 = vld [vmem:[#allocation2 + $0x28] sm:$0xff]
        %v932 = vld [vmem:[#allocation2 + $0x30] sm:$0xff]
        %v933 = vld [vmem:[#allocation2 + $0x38] sm:$0xff]
        %v934 = vadd.f32 %v908, %v926
        %v935 = vadd.f32 %v910, %v927
        %v936 = vadd.f32 %v912, %v928
        %v937 = vadd.f32 %v914, %v929
        %v938 = vadd.f32 %v918, %v930
        %v939 = vadd.f32 %v920, %v931
        %v940 = vadd.f32 %v922, %v932
        %v941 = vadd.f32 %v924, %v933
        %v942 = vmax.f32 %v934, 0.0
        %v943 = vmax.f32 %v935, 0.0
        %v944 = vmax.f32 %v936, 0.0
        %v945 = vmax.f32 %v937, 0.0
        %v946 = vmax.f32 %v938, 0.0
        %v947 = vmax.f32 %v939, 0.0
        %v948 = vmax.f32 %v940, 0.0
        %v949 = vmax.f32 %v941, 0.0
        %950 = vst [vmem:[%s311] sm:$0xff] %v942
        %951 = vst [vmem:[%s311 + $0x8] sm:$0xff] %v943
        %952 = vst [vmem:[%s311 + $0x10] sm:$0xff] %v944
        %953 = vst [vmem:[%s311 + $0x18] sm:$0xff] %v945
        %954 = vst [vmem:[%s311 + $0x20] sm:$0xff] %v946
        %955 = vst [vmem:[%s311 + $0x28] sm:$0xff] %v947
        %956 = vst [vmem:[%s311 + $0x30] sm:$0xff] %v948
        %957 = vst [vmem:[%s311 + $0x38] sm:$0xff] %v949
        %s958 = sand.u32 %s178, 1
        %s959 = sand.u32 %s178, 1
        %s960 = smul.addr %s959, 64
        %s961 = scalar_lea.vmem [#allocation4], %s960
        // Predicated region
        $region87: #{mainblock_forward.1} parent=81 // pred_check
          %p962 = pneg %p188
        $region88: #{mainblock_forward.1} parent=81 // pred_check_branch
          %964 = sbr.rel (%p962) target = $region90
        $region89: #{mainblock_forward.1} parent=81 // pred_region
          %s965 = smul.u32 2, %s18
          %s966 = smul.addr %s965, 8
          %s967 = scalar_lea.vmem %s7, %s966
          // Predicated region
          $region91: #{mainblock_forward.1} parent=89 // pred_check
            _
          $region92: #{mainblock_forward.1} parent=89 // pred_check_branch
            %969 = sbr.rel (0) target = $region94
          $region93: #{mainblock_forward.1} parent=89 // pred_region
            // Predicated region
            $region95: #{mainblock_forward.1} parent=93 // pred_check
              _
            $region96: #{mainblock_forward.1} parent=93 // pred_check_branch
              %971 = sbr.rel (0) target = $region98
            $region97: #{mainblock_forward.1} parent=93 // pred_region
              loop: start=0, step=1, limit=1
              $region99: #{mainblock_forward.1} parent=97 // loop_pre_header
                _
              $region100: #{mainblock_forward.1} parent=97 // loop_header
                %s973 = sphi 0, %s977
                %p974 = scmp.ge.s32.totalorder %s973, 1
                %s978 = sphi %s961, %s961
                %s979 = sphi %s967, %s967
              $region101: #{mainblock_forward.1} parent=97 // loop_header_branch
                %976 = sbr.rel (%p974) target = $region105
              $region102: #{mainblock_forward.1} parent=97 // loop_body
                %v980 = vld [vmem:[%s978] sm:$0xff]
                %981 = vst [vmem:[%s979] sm:$0xff] %v980
                %v982 = vld [vmem:[%s978 + $0x8] sm:$0xff]
                %983 = vst [vmem:[%s979 + $0x8] sm:$0xff] %v982
                %v984 = vld [vmem:[%s978 + $0x10] sm:$0xff]
                %985 = vst [vmem:[%s979 + $0x20] sm:$0xff] %v984
                %v986 = vld [vmem:[%s978 + $0x18] sm:$0xff]
                %987 = vst [vmem:[%s979 + $0x28] sm:$0xff] %v986
                %v988 = vld [vmem:[%s978 + $0x20] sm:$0xff]
                %989 = vst [vmem:[%s979 + $0x40] sm:$0xff] %v988
                %v990 = vld [vmem:[%s978 + $0x28] sm:$0xff]
                %991 = vst [vmem:[%s979 + $0x48] sm:$0xff] %v990
                %v992 = vld [vmem:[%s978 + $0x30] sm:$0xff]
                %993 = vst [vmem:[%s979 + $0x60] sm:$0xff] %v992
                %v994 = vld [vmem:[%s978 + $0x38] sm:$0xff]
                %995 = vst [vmem:[%s979 + $0x68] sm:$0xff] %v994
              $region103: #{mainblock_forward.1} parent=97 // loop_footer
                %s977 = sadd.s32 1, %s973
              $region104: #{mainblock_forward.1} parent=97 // loop_footer_branch
                %972 = sbr.rel target = $region100
              $region105: #{mainblock_forward.1} parent=97 // loop_exit
                _
            $region98: #{mainblock_forward.1} parent=93 // pred_fallthru
              _
            // Predicated region
            $region106: #{mainblock_forward.1} parent=93 // pred_check
              _
            $region107: #{mainblock_forward.1} parent=93 // pred_check_branch
              %997 = sbr.rel target = $region109
            $region108: #{mainblock_forward.1} parent=93 // pred_region
              _
            $region109: #{mainblock_forward.1} parent=93 // pred_fallthru
              _
          $region94: #{mainblock_forward.1} parent=89 // pred_fallthru
            _
          %998 = vnop
        $region90: #{mainblock_forward.1} parent=81 // pred_fallthru
          _
      $region82: #{mainblock_forward.1} parent=5 // pred_fallthru
        _
      %p999 = scmp.le.s32.totalorder 2, %s13
      // Predicated region
      $region110: #{mainblock_forward.1} parent=5 // pred_check
        %p1000 = pneg %p999
      $region111: #{mainblock_forward.1} parent=5 // pred_check_branch
        %1002 = sbr.rel (%p1000) target = $region113
      $region112: #{mainblock_forward.1} parent=5 // pred_region
        %s1003 = ssub.s32 %s13, 2
        // Predicated region
        $region114: #{mainblock_forward.1} parent=112 // pred_check
          %p1004 = pneg %p194
        $region115: #{mainblock_forward.1} parent=112 // pred_check_branch
          %1006 = sbr.rel (%p1004) target = $region117
        $region116: #{mainblock_forward.1} parent=112 // pred_region
          %s1007 = sand.u32 %s179, 1
          %s1008 = sand.u32 %s179, 1
          %s1009 = smul.addr %s1008, 64
          %s1010 = scalar_lea.vmem [#allocation4], %s1009
        $region117: #{mainblock_forward.1} parent=112 // pred_fallthru
          _
      $region113: #{mainblock_forward.1} parent=5 // pred_fallthru
        _
    $region6: #{mainblock_forward.1} parent=1 // loop_footer
      %s17 = sadd.s32 1, %s13
    $region7: #{mainblock_forward.1} parent=1 // loop_footer_branch
      %12 = sbr.rel target = $region3
    $region8: #{mainblock_forward.1} parent=1 // loop_exit
      _

</llo_original>
